<compile_context>
chip_gen: v7x
topology: tpu7x:2x2x1
jax: 0.10.0
libtpu: 0.0.40
codegen_flags: <defaults>
</compile_context>

<pallas_src>
import jax
import jax.numpy as jnp
from jax.experimental import pallas as pl
from jax.experimental.pallas import tpu as pltpu

LANE = 128


def _round_up(a, b):
    return ((a + b - 1) // b) * b


def _vmem_capacity_bytes():
    """Physical VMEM per TensorCore (generation-aware; 128 MiB fallback)."""
    try:
        cap = getattr(pltpu.get_tpu_info(), "vmem_capacity_bytes", None)
        if cap:
            return int(cap)
    except Exception:
        pass
    return 128 * 1024 * 1024


def ffn_kernel(x_ref, w1_ref, b1_ref, w2_ref, b2_ref, o_ref, acc_ref):
    # x_ref:  (tm, d_p)      row tile of the flattened input
    # w1_ref: (d_p, th)      W1^T hidden chunk
    # b1_ref: (1, th)  f32   bias chunk
    # w2_ref: (th, d_p)      W2^T hidden chunk
    # b2_ref: (1, d_p) f32
    # o_ref:  (tm, d_p)      written on the last hidden chunk
    # acc_ref:(tm, d_p) f32  resident accumulator scratch
    j = pl.program_id(1)

    @pl.when(j == 0)
    def _init():
        acc_ref[...] = jnp.zeros_like(acc_ref)

    # Linear1 chunk on the MXU (compute dtype), f32 accumulation.
    h = jnp.dot(x_ref[...], w1_ref[...], preferred_element_type=jnp.float32)
    # Bias + ReLU epilogue in f32 (VPU). Padded hidden columns stay exactly 0.
    h = jnp.maximum(h + b1_ref[...], 0.0)
    # Dropout: identity (eval mode).
    # TODO(synk): training-mode dropout needs pltpu.prng_seed + stateful_bernoulli.

    # Linear2 chunk accumulated into the f32 scratch. Any bf16 cast of h is
    # per-chunk (tm, th), never a full-width materialization.
    acc_ref[...] += jnp.dot(h.astype(w2_ref.dtype), w2_ref[...],
                            preferred_element_type=jnp.float32)

    @pl.when(j == pl.num_programs(1) - 1)
    def _finalize():
        o_ref[...] = (acc_ref[...] + b2_ref[...]).astype(o_ref.dtype)


def positionwise_ffn(x, w1, b1, w2, b2, *, tm=None, compute_dtype=None,
                     max_hidden_chunk=2048):
    """FFN forward: Linear2(Dropout(ReLU(Linear1(x)))); dropout = eval identity.

    x:  (batch, seq, d_model)
    w1: (d_model, hidden) == W1^T, b1: (hidden,)
    w2: (hidden, d_model) == W2^T, b2: (d_model,)
    compute_dtype: optional MXU dtype (e.g. jnp.bfloat16). Default: x.dtype.
    Returns (batch, seq, d_model) in x.dtype.
    """
    batch, seq, d_model = x.shape
    hidden = w1.shape[1]
    M = batch * seq
    out_dtype = x.dtype

    cdt = jnp.dtype(compute_dtype) if compute_dtype is not None else jnp.dtype(x.dtype)
    w_bytes = cdt.itemsize
    x_bytes = cdt.itemsize
    out_bytes = jnp.dtype(out_dtype).itemsize

    # ---- Generation-aware VMEM budget --------------------------------------
    cap = _vmem_capacity_bytes()                       # 64 MiB (v7x) / 128 MiB (v5e/v6e)
    vmem_limit = max(min(int(cap * 0.9), cap - (8 << 20)), 32 << 20)
    budget = vmem_limit - (4 << 20)                    # headroom for Mosaic internals

    # ---- Lane-dense feature padding -----------------------------------------
    d_p = _round_up(d_model, LANE)
    h_p = _round_up(hidden, LANE)

    # ---- Hidden chunking / weight residency decision ------------------------
    full_w_bytes = 2 * d_p * h_p * w_bytes             # W1 + W2, single-buffered
    weights_resident = (full_w_bytes <= int(budget * 0.55)) and (h_p <= max_hidden_chunk)
    if weights_resident:
        th = h_p
        weight_footprint = full_w_bytes + (h_p + d_p) * 4
    else:
        th = min(h_p, max(LANE, (int(max_hidden_chunk) // LANE) * LANE))
        while th > LANE and 4 * d_p * th * w_bytes > int(budget * 0.4):
            th -= LANE
        weight_footprint = 4 * d_p * th * w_bytes + 2 * (th + d_p) * 4
    H_pad = _round_up(hidden, th)
    n_h = H_pad // th

    # ---- Row tile: dtype/MXU-aware, budget-checked, >=2 steps when possible --
    row_align = max(8, 32 // cdt.itemsize)             # 8 (f32) / 16 (bf16) / 32 (int8,fp8)
    M_r = _round_up(M, row_align)
    if tm is None:
        if cap >= (96 << 20):
            tm = 1024 if d_p <= 1024 else 512
        else:
            tm = 256
    tm_eff = min(_round_up(tm, row_align), M_r)
    if M_r >= 2 * row_align:
        # At least 2 row steps so dimension_semantics="parallel" can use both
        # TensorCores on v7x (free ~2x for small/medium M).
        tm_eff = min(tm_eff, _round_up((M_r + 1) // 2, row_align))

    row_budget = budget - weight_footprint

    def _row_bytes(t):
        b = 2 * t * d_p * x_bytes          # x tile, double-buffered
        b += 2 * t * d_p * out_bytes       # out tile, double-buffered
        b += t * d_p * 4                   # f32 accumulator scratch
        b += t * th * 4                    # live f32 h chunk
        if w_bytes != 4:
            b += t * th * w_bytes          # per-chunk cast copy of h
        return b

    while tm_eff > row_align and _row_bytes(tm_eff) > row_budget:
        tm_eff = max(row_align, _round_up(tm_eff // 2, row_align))

    n_rows = -(-M_r // tm_eff)
    M_pad = n_rows * tm_eff

    # ---- Pad / cast operands (zero padding is exact; skipped when no-op) -----
    x2 = x.reshape(M, d_model)
    if x2.dtype != cdt:
        x2 = x2.astype(cdt)
    if M_pad != M or d_p != d_model:
        x2 = jnp.pad(x2, ((0, M_pad - M), (0, d_p - d_model)))

    w1p = w1 if w1.dtype == cdt else w1.astype(cdt)
    w2p = w2 if w2.dtype == cdt else w2.astype(cdt)
    if w1p.shape != (d_p, H_pad):
        w1p = jnp.pad(w1p, ((0, d_p - d_model), (0, H_pad - hidden)))
    if w2p.shape != (H_pad, d_p):
        w2p = jnp.pad(w2p, ((0, H_pad - hidden), (0, d_p - d_model)))
    b1p = b1.astype(jnp.float32)
    b2p = b2.astype(jnp.float32)
    if H_pad != hidden:
        b1p = jnp.pad(b1p, (0, H_pad - hidden))
    if d_p != d_model:
        b2p = jnp.pad(b2p, (0, d_p - d_model))
    b1p = b1p.reshape(1, H_pad)
    b2p = b2p.reshape(1, d_p)

    # ---- BlockSpecs ----------------------------------------------------------
    def _spec(shape, index_map, resident):
        if resident:
            # Constant block index -> single-buffer to halve VMEM footprint.
            try:
                return pl.BlockSpec(shape, index_map, pipeline_mode=pl.Buffered(1))
            except Exception:
                pass
        return pl.BlockSpec(shape, index_map)

    in_specs = [
        pl.BlockSpec((tm_eff, d_p), lambda i, j: (i, 0)),             # x rows (pipelined)
        _spec((d_p, th), lambda i, j: (0, j), weights_resident),      # W1^T chunk
        _spec((1, th), lambda i, j: (0, j), weights_resident),        # b1 chunk
        _spec((th, d_p), lambda i, j: (j, 0), weights_resident),      # W2^T chunk
        _spec((1, d_p), lambda i, j: (0, 0), True),                   # b2 (constant)
    ]
    out_spec = pl.BlockSpec((tm_eff, d_p), lambda i, j: (i, 0))

    # ---- Cost estimate (advisory) --------------------------------------------
    weight_reads = 1 if weights_resident else n_rows
    try:
        cost = pl.CostEstimate(
            flops=int(4 * M_pad * d_p * H_pad),
            transcendentals=0,
            bytes_accessed=int(M_pad * d_p * (x_bytes + out_bytes)
                               + weight_reads * 2 * d_p * H_pad * w_bytes
                               + 4 * (H_pad + d_p)),
        )
    except Exception:
        cost = None

    out = pl.pallas_call(
        ffn_kernel,
        out_shape=jax.ShapeDtypeStruct((M_pad, d_p), out_dtype),
        grid_spec=pltpu.PrefetchScalarGridSpec(
            num_scalar_prefetch=0,
            grid=(n_rows, n_h),
            in_specs=in_specs,
            out_specs=out_spec,
            scratch_shapes=[pltpu.VMEM((tm_eff, d_p), jnp.float32)],
        ),
        compiler_params=pltpu.CompilerParams(
            dimension_semantics=("parallel", "arbitrary"),
            vmem_limit_bytes=int(vmem_limit),
        ),
        cost_estimate=cost,
    )(x2, w1p, b1p, w2p, b2p)

    return out[:M, :d_model].reshape(batch, seq, d_model)


def ffn_reference(x, w1, b1, w2, b2):
    h = jnp.maximum(jnp.einsum("bsd,dh->bsh", x, w1) + b1, 0.0)
    return jnp.einsum("bsh,hd->bsd", h, w2) + b2


if __name__ == "__main__":
    # Small shapes consistent with the module: batch=2, seq=8, d_model=32, hidden=64.
    batch, seq, d_model, hidden = 2, 8, 32, 64

    key = jax.random.PRNGKey(0)
    kx, kw1, kb1, kw2, kb2, kx2 = jax.random.split(key, 6)

    # Deterministic init mimicking nn.Linear's U(-1/sqrt(fan_in), 1/sqrt(fan_in)).
    # Stored pre-transposed: w1 is (d_model, hidden) == W1^T, w2 is (hidden, d_model) == W2^T.
    bound1 = 1.0 / (d_model ** 0.5)
    bound2 = 1.0 / (hidden ** 0.5)
    w1 = jax.random.uniform(kw1, (d_model, hidden), jnp.float32, -bound1, bound1)
    b1 = jax.random.uniform(kb1, (hidden,), jnp.float32, -bound1, bound1)
    w2 = jax.random.uniform(kw2, (hidden, d_model), jnp.float32, -bound2, bound2)
    b2 = jax.random.uniform(kb2, (d_model,), jnp.float32, -bound2, bound2)

    # Case 1: the tiny module-spec shape (resident-weight path, 2 row steps).
    x = jax.random.normal(kx, (batch, seq, d_model), dtype=jnp.float32)
    y = jax.block_until_ready(positionwise_ffn(x, w1, b1, w2, b2))
    y_ref = ffn_reference(x, w1, b1, w2, b2)
    assert y.shape == (batch, seq, d_model)
    assert jnp.allclose(y, y_ref, atol=1e-5, rtol=1e-5), "mismatch vs reference (case 1)"

    # Case 2: rows not divisible by the tile -> row padding + multi-step row grid.
    xb = jax.random.normal(kx2, (3, 100, d_model), dtype=jnp.float32)
    yb = jax.block_until_ready(positionwise_ffn(xb, w1, b1, w2, b2))
    yb_ref = ffn_reference(xb, w1, b1, w2, b2)
    assert jnp.allclose(yb, yb_ref, atol=1e-5, rtol=1e-5), "mismatch vs reference (case 2)"

    # Case 3: bf16 MXU path (f32 accumulation + f32 epilogue), looser tolerance.
    yc = jax.block_until_ready(
        positionwise_ffn(x, w1, b1, w2, b2, compute_dtype=jnp.bfloat16))
    assert jnp.allclose(yc, y_ref, atol=6e-2, rtol=6e-2), "mismatch vs reference (bf16)"

    # Case 4: hidden-chunked (streamed-weight) path with accumulation over chunks.
    hidden2 = 320
    kw3, kb3, kw4, kb4 = jax.random.split(jax.random.PRNGKey(1), 4)
    b3_bound = 1.0 / (d_model ** 0.5)
    b4_bound = 1.0 / (hidden2 ** 0.5)
    w3 = jax.random.uniform(kw3, (d_model, hidden2), jnp.float32, -b3_bound, b3_bound)
    b3 = jax.random.uniform(kb3, (hidden2,), jnp.float32, -b3_bound, b3_bound)
    w4 = jax.random.uniform(kw4, (hidden2, d_model), jnp.float32, -b4_bound, b4_bound)
    b4 = jax.random.uniform(kb4, (d_model,), jnp.float32, -b4_bound, b4_bound)
    yd = jax.block_until_ready(
        positionwise_ffn(x, w3, b3, w4, b4, max_hidden_chunk=128))
    yd_ref = ffn_reference(x, w3, b3, w4, b4)
    assert jnp.allclose(yd, yd_ref, atol=1e-4, rtol=1e-4), "mismatch vs reference (chunked)"

    print("KERNEL_OK")
</pallas_src>

<mosaic_0001>
module attributes {stable_mosaic.version = 11 : i64} {
  func.func @ffn_kernel(%arg0: i32, %arg1: i32, %arg2: memref<8x128xf32, #tpu.memory_space<vmem>>, %arg3: memref<128x128xf32, #tpu.memory_space<vmem>>, %arg4: memref<1x128xf32, #tpu.memory_space<vmem>>, %arg5: memref<128x128xf32, #tpu.memory_space<vmem>>, %arg6: memref<1x128xf32, #tpu.memory_space<vmem>>, %arg7: memref<8x128xf32, #tpu.memory_space<vmem>>, %arg8: memref<8x128xf32, #tpu.memory_space<vmem>>) attributes {dimension_semantics = [#tpu.dimension_semantics<parallel>, #tpu.dimension_semantics<arbitrary>], iteration_bounds = array<i64: 2, 1>, scalar_prefetch = 0 : i64, scratch_operands = 1 : i64, tpu.core_type = #tpu.core_type<tc>, window_params = [{transform_indices = @transform_0, window_bounds = array<i64: 8, 128>}, {pipeline_mode = #tpu.pipeline_mode<synchronous>, transform_indices = @transform_1, window_bounds = array<i64: 128, 128>}, {pipeline_mode = #tpu.pipeline_mode<synchronous>, transform_indices = @transform_2, window_bounds = array<i64: 1, 128>}, {pipeline_mode = #tpu.pipeline_mode<synchronous>, transform_indices = @transform_3, window_bounds = array<i64: 128, 128>}, {pipeline_mode = #tpu.pipeline_mode<synchronous>, transform_indices = @transform_4, window_bounds = array<i64: 1, 128>}, {transform_indices = @transform_5, window_bounds = array<i64: 8, 128>}]} {
    %c0_i32 = arith.constant 0 : i32
    %0 = arith.cmpi eq, %arg1, %c0_i32 : i32
    %1 = arith.extui %0 : i1 to i32
    %c0_i32_0 = arith.constant 0 : i32
    %2 = arith.cmpi ne, %1, %c0_i32_0 : i32
    scf.if %2 {
      %cst_16 = arith.constant 0.000000e+00 : f32
      %19 = vector.broadcast %cst_16 : f32 to vector<8x128xf32>
      %c0_17 = arith.constant 0 : index
      %c0_18 = arith.constant 0 : index
      %20 = vector.load %arg8[%c0_17, %c0_18] : memref<8x128xf32, #tpu.memory_space<vmem>>, vector<8x128xf32>
      tpu.vector_store %arg8[%c0_17, %c0_18], %19 {strides = array<i32>} : memref<8x128xf32, #tpu.memory_space<vmem>>, vector<8x128xf32>,
    } else {
    }
    %c0 = arith.constant 0 : index
    %c0_1 = arith.constant 0 : index
    %3 = vector.load %arg2[%c0, %c0_1] : memref<8x128xf32, #tpu.memory_space<vmem>>, vector<8x128xf32>
    %c0_2 = arith.constant 0 : index
    %c0_3 = arith.constant 0 : index
    %4 = vector.load %arg3[%c0_2, %c0_3] : memref<128x128xf32, #tpu.memory_space<vmem>>, vector<128x128xf32>
    %cst = arith.constant dense<0.000000e+00> : vector<8x128xf32>
    %5 = tpu.matmul %3, %4, %cst {dimension_numbers = #tpu.dot_dimension_numbers<[1], [0], [0], [1], [0, 0, 1, 1], [], []>} : vector<8x128xf32>, vector<128x128xf32>, vector<8x128xf32> -> vector<8x128xf32>
    %c0_4 = arith.constant 0 : index
    %c0_5 = arith.constant 0 : index
    %6 = vector.load %arg4[%c0_4, %c0_5] : memref<1x128xf32, #tpu.memory_space<vmem>>, vector<1x128xf32>
    %7 = vector.broadcast %6 : vector<1x128xf32> to vector<8x128xf32>
    %8 = arith.addf %5, %7 : vector<8x128xf32>
    %cst_6 = arith.constant 0.000000e+00 : f32
    %9 = vector.broadcast %cst_6 : f32 to vector<8x128xf32>
    %10 = arith.maximumf %8, %9 : vector<8x128xf32>
    %c0_7 = arith.constant 0 : index
    %c0_8 = arith.constant 0 : index
    %11 = vector.load %arg8[%c0_7, %c0_8] : memref<8x128xf32, #tpu.memory_space<vmem>>, vector<8x128xf32>
    %c0_9 = arith.constant 0 : index
    %c0_10 = arith.constant 0 : index
    %12 = vector.load %arg5[%c0_9, %c0_10] : memref<128x128xf32, #tpu.memory_space<vmem>>, vector<128x128xf32>
    %cst_11 = arith.constant dense<0.000000e+00> : vector<8x128xf32>
    %13 = tpu.matmul %10, %12, %cst_11 {dimension_numbers = #tpu.dot_dimension_numbers<[1], [0], [0], [1], [0, 0, 1, 1], [], []>} : vector<8x128xf32>, vector<128x128xf32>, vector<8x128xf32> -> vector<8x128xf32>
    %14 = arith.addf %11, %13 : vector<8x128xf32>
    %c0_12 = arith.constant 0 : index
    %c0_13 = arith.constant 0 : index
    %15 = vector.load %arg8[%c0_12, %c0_13] : memref<8x128xf32, #tpu.memory_space<vmem>>, vector<8x128xf32>
    tpu.vector_store %arg8[%c0_12, %c0_13], %14 {strides = array<i32>} : memref<8x128xf32, #tpu.memory_space<vmem>>, vector<8x128xf32>,
    %c0_i32_14 = arith.constant 0 : i32
    %16 = arith.cmpi eq, %arg1, %c0_i32_14 : i32
    %17 = arith.extui %16 : i1 to i32
    %c0_i32_15 = arith.constant 0 : i32
    %18 = arith.cmpi ne, %17, %c0_i32_15 : i32
    scf.if %18 {
      %c0_16 = arith.constant 0 : index
      %c0_17 = arith.constant 0 : index
      %19 = vector.load %arg8[%c0_16, %c0_17] : memref<8x128xf32, #tpu.memory_space<vmem>>, vector<8x128xf32>
      %c0_18 = arith.constant 0 : index
      %c0_19 = arith.constant 0 : index
      %20 = vector.load %arg6[%c0_18, %c0_19] : memref<1x128xf32, #tpu.memory_space<vmem>>, vector<1x128xf32>
      %21 = vector.broadcast %20 : vector<1x128xf32> to vector<8x128xf32>
      %22 = arith.addf %19, %21 : vector<8x128xf32>
      %c0_20 = arith.constant 0 : index
      %c0_21 = arith.constant 0 : index
      %23 = vector.load %arg7[%c0_20, %c0_21] : memref<8x128xf32, #tpu.memory_space<vmem>>, vector<8x128xf32>
      tpu.vector_store %arg7[%c0_20, %c0_21], %22 {strides = array<i32>} : memref<8x128xf32, #tpu.memory_space<vmem>>, vector<8x128xf32>,
    } else {
    }
    return
  }
  func.func @transform_0(%arg0: i32, %arg1: i32) -> (i32, i32) {
    %c0_i32 = arith.constant 0 : i32
    %c0_i32_0 = arith.constant 0 : i32
    return %arg0, %c0_i32 : i32, i32
  }
  func.func @transform_1(%arg0: i32, %arg1: i32) -> (i32, i32) {
    %c0_i32 = arith.constant 0 : i32
    %c0_i32_0 = arith.constant 0 : i32
    return %c0_i32, %arg1 : i32, i32
  }
  func.func @transform_2(%arg0: i32, %arg1: i32) -> (i32, i32) {
    %c0_i32 = arith.constant 0 : i32
    %c0_i32_0 = arith.constant 0 : i32
    return %c0_i32, %arg1 : i32, i32
  }
  func.func @transform_3(%arg0: i32, %arg1: i32) -> (i32, i32) {
    %c0_i32 = arith.constant 0 : i32
    %c0_i32_0 = arith.constant 0 : i32
    return %arg1, %c0_i32 : i32, i32
  }
  func.func @transform_4(%arg0: i32, %arg1: i32) -> (i32, i32) {
    %c0_i32 = arith.constant 0 : i32
    %c0_i32_0 = arith.constant 0 : i32
    %c0_i32_1 = arith.constant 0 : i32
    return %c0_i32, %c0_i32_0 : i32, i32
  }
  func.func @transform_5(%arg0: i32, %arg1: i32) -> (i32, i32) {
    %c0_i32 = arith.constant 0 : i32
    %c0_i32_0 = arith.constant 0 : i32
    return %arg0, %c0_i32 : i32, i32
  }
}

</mosaic_0001>

<llo_original>
// kernel: tpu_custom_call.1
$region0: #{tpu_custom_call.1}
  #allocation0 [shape = 'u32[]', space=smem, size = 0x4, offset = 0x4, fixed_abs, tag = 'smem constant byte address 0x4 - core index']
  #allocation1 [shape = 'u32[144,128]{1,0:T(1,128)}', space=vmem, size = 0x12000, scoped, tag = 'internal scratch']
  #allocation2 [shape = 'f32[8,128]{1,0:T(8,128)}', space=vmem, size = 0x1000, scoped, tag = 'scratch operand']
  %s0 = inlined_call_operand.hbm [shape: f32[16,128], index: 0, kind: input, shape index: {}]
  %s1 = inlined_call_operand.hbm [shape: f32[128,128], index: 1, kind: input, shape index: {}]
  %s2 = inlined_call_operand.hbm [shape: f32[1,128], index: 2, kind: input, shape index: {}]
  %s3 = inlined_call_operand.hbm [shape: f32[128,128], index: 3, kind: input, shape index: {}]
  %s4 = inlined_call_operand.hbm [shape: f32[1,128], index: 4, kind: input, shape index: {}]
  %s5 = inlined_call_operand.hbm [shape: f32[16,128], index: 5, kind: output, shape index: {}]
  %s6 = sld [smem:[#allocation0]]
  $region81: #{tpu_custom_call.1} parent=0
    _
  %s8 = ssub.s32 1, %s6
  %s9 = scalar_select 0, %s8, %s6
  $region1: #{tpu_custom_call.1} parent=0
    #allocation3 [shape = 'u8[8192]{0}', space=vmem, size = 0x2000, scoped, tag = 'input window, operand 0']
    #allocation4 [shape = 's32[2]{0}', space=sflag, size = 0x8, scoped, tag = 'scoped memory for tpu_custom_call.1']
    #allocation5 [shape = 's32[2]{0}', space=sflag, size = 0x8, scoped, tag = 'scoped memory for tpu_custom_call.1']
    #allocation6 [shape = 'u8[65536]{0}', space=vmem, size = 0x10000, scoped, tag = 'input window, operand 1, single buffered']
    #allocation7 [shape = 's32[1]{0}', space=sflag, size = 0x4, scoped, tag = 'scoped memory for tpu_custom_call.1']
    #allocation8 [shape = 'u8[512]{0}', space=vmem, size = 0x400, scoped, tag = 'input window, operand 2, single buffered']
    #allocation9 [shape = 'u8[65536]{0}', space=vmem, size = 0x10000, scoped, tag = 'input window, operand 3, single buffered']
    #allocation10 [shape = 's32[1]{0}', space=sflag, size = 0x4, scoped, tag = 'scoped memory for tpu_custom_call.1']
    #allocation11 [shape = 'u8[512]{0}', space=vmem, size = 0x400, scoped, tag = 'input window, operand 4, single buffered']
    #allocation12 [shape = 'u8[8192]{0}', space=vmem, size = 0x2000, scoped, tag = 'output window, operand 0']
    %10 = vsyncpa [#allocation4], 0
    %s11 = scalar_lea.sflag [#allocation4], 1
    %12 = vsyncpa %s11, 0
    %13 = vsyncpa [#allocation7], 0
    %14 = vsyncpa [#allocation10], 0
    %15 = vsyncpa [#allocation5], 0
    %s16 = scalar_lea.sflag [#allocation5], 1
    %17 = vsyncpa %s16, 0
    loop: start=0, step=1, limit=4
    $region2: #{tpu_custom_call.1} parent=1 // loop_pre_header
      _
    $region3: #{tpu_custom_call.1} parent=1 // loop_header
      %s19 = sphi 0, %s23
      %p20 = scmp.ge.s32.totalorder %s19, 4
      %s26 = sphi 0, %s38
      %s27 = sphi 0, %s34
      %s28 = sphi 0, %s26
      %s29 = sphi 0, %s27
      %s30 = sphi 0, %s28
      %s31 = sphi 0, %s29
      %s41 = sphi 0, %s43
      %s44 = sphi 0, %s41
      %s45 = sphi 0, %s44
      %s61 = sphi 0, %s45
      %s67 = sphi 0, %s69
      %s70 = sphi 0, %s67
      %s71 = sphi 0, %s70
      %s87 = sphi 0, %s71
      %s93 = sphi 0, %s95
      %s96 = sphi 0, %s93
      %s97 = sphi 0, %s96
      %s113 = sphi 0, %s97
      %s119 = sphi 0, %s121
      %s122 = sphi 0, %s119
      %s123 = sphi 0, %s122
      %s139 = sphi 0, %s123
      %s143 = sphi 0, %s143
      %s145 = sphi 0, %s143
      %s146 = sphi 0, %s145
      %s160 = sphi 0, %s146
      %s166 = sphi 0, %s168
      %s169 = sphi 0, %s166
      %s170 = sphi 0, %s169
      %s186 = sphi 0, %s170
    $region4: #{tpu_custom_call.1} parent=1 // loop_header_branch
      %22 = sbr.rel (%p20) target = $region8
    $region5: #{tpu_custom_call.1} parent=1 // loop_body
      %s24 = ssub.s32 %s19, 1
      %s25 = ssub.s32 %s19, 2
      %s32 = sadd.s32 1, %s27
      %p33 = scmp.ge.s32.totalorder %s32, 1
      %s34 = scalar_select %p33, 0, %s32
      %s35 = sadd.s32 1, %s26
      %s36 = scalar_select %p33, %s35, %s26
      %p37 = scmp.ge.s32.totalorder %s36, 2
      %s38 = scalar_select %p37, 0, %s36
      %s39 = ssub.s32 %s26, %s38
      %p40 = scmp.eq.s32.totalorder %s39, 0
      %s42 = sadd.s32 %s41, 1
      %s43 = scalar_select %p40, %s41, %s42
      %p46 = pneg %p40
      %p47 = scmp.eq.s32.totalorder %s19, 1
      %p48 = por %p46, %p47
      %p49 = scmp.ne.s32.totalorder %s41, %s44
      %p50 = scmp.eq.s32.totalorder %s19, 0
      %p51 = por %p49, %p50
      %p52 = scmp.ne.s32.totalorder %s41, %s44
      %p53 = scmp.eq.s32.totalorder %s24, 1
      %p54 = por %p52, %p53
      %p55 = scmp.ne.s32.totalorder %s44, %s45
      %p56 = scmp.eq.s32.totalorder %s24, 0
      %p57 = por %p55, %p56
      %p58 = scmp.ne.s32.totalorder %s44, %s45
      %p59 = scmp.eq.s32.totalorder %s25, 1
      %p60 = por %p58, %p59
      %p62 = scmp.ne.s32.totalorder %s45, %s61
      %p63 = scmp.eq.s32.totalorder %s25, 0
      %p64 = por %p62, %p63
      %s65 = ssub.s32 %s27, %s34
      %p66 = scmp.eq.s32.totalorder %s65, 0
      %s68 = sadd.s32 %s67, 1
      %s69 = scalar_select %p66, %s67, %s68
      %p72 = pneg %p66
      %p73 = scmp.eq.s32.totalorder %s19, 1
      %p74 = por %p72, %p73
      %p75 = scmp.ne.s32.totalorder %s67, %s70
      %p76 = scmp.eq.s32.totalorder %s19, 0
      %p77 = por %p75, %p76
      %p78 = scmp.ne.s32.totalorder %s67, %s70
      %p79 = scmp.eq.s32.totalorder %s24, 1
      %p80 = por %p78, %p79
      %p81 = scmp.ne.s32.totalorder %s70, %s71
      %p82 = scmp.eq.s32.totalorder %s24, 0
      %p83 = por %p81, %p82
      %p84 = scmp.ne.s32.totalorder %s70, %s71
      %p85 = scmp.eq.s32.totalorder %s25, 1
      %p86 = por %p84, %p85
      %p88 = scmp.ne.s32.totalorder %s71, %s87
      %p89 = scmp.eq.s32.totalorder %s25, 0
      %p90 = por %p88, %p89
      %s91 = ssub.s32 %s27, %s34
      %p92 = scmp.eq.s32.totalorder %s91, 0
      %s94 = sadd.s32 %s93, 1
      %s95 = scalar_select %p92, %s93, %s94
      %p98 = pneg %p92
      %p99 = scmp.eq.s32.totalorder %s19, 1
      %p100 = por %p98, %p99
      %p101 = scmp.ne.s32.totalorder %s93, %s96
      %p102 = scmp.eq.s32.totalorder %s19, 0
      %p103 = por %p101, %p102
      %p104 = scmp.ne.s32.totalorder %s93, %s96
      %p105 = scmp.eq.s32.totalorder %s24, 1
      %p106 = por %p104, %p105
      %p107 = scmp.ne.s32.totalorder %s96, %s97
      %p108 = scmp.eq.s32.totalorder %s24, 0
      %p109 = por %p107, %p108
      %p110 = scmp.ne.s32.totalorder %s96, %s97
      %p111 = scmp.eq.s32.totalorder %s25, 1
      %p112 = por %p110, %p111
      %p114 = scmp.ne.s32.totalorder %s97, %s113
      %p115 = scmp.eq.s32.totalorder %s25, 0
      %p116 = por %p114, %p115
      %s117 = ssub.s32 %s27, %s34
      %p118 = scmp.eq.s32.totalorder %s117, 0
      %s120 = sadd.s32 %s119, 1
      %s121 = scalar_select %p118, %s119, %s120
      %p124 = pneg %p118
      %p125 = scmp.eq.s32.totalorder %s19, 1
      %p126 = por %p124, %p125
      %p127 = scmp.ne.s32.totalorder %s119, %s122
      %p128 = scmp.eq.s32.totalorder %s19, 0
      %p129 = por %p127, %p128
      %p130 = scmp.ne.s32.totalorder %s119, %s122
      %p131 = scmp.eq.s32.totalorder %s24, 1
      %p132 = por %p130, %p131
      %p133 = scmp.ne.s32.totalorder %s122, %s123
      %p134 = scmp.eq.s32.totalorder %s24, 0
      %p135 = por %p133, %p134
      %p136 = scmp.ne.s32.totalorder %s122, %s123
      %p137 = scmp.eq.s32.totalorder %s25, 1
      %p138 = por %p136, %p137
      %p140 = scmp.ne.s32.totalorder %s123, %s139
      %p141 = scmp.eq.s32.totalorder %s25, 0
      %p142 = por %p140, %p141
      %s144 = sadd.s32 %s143, 1
      %p147 = scmp.eq.s32.totalorder %s19, 1
      %p148 = scmp.ne.s32.totalorder %s143, %s145
      %p149 = scmp.eq.s32.totalorder %s19, 0
      %p150 = por %p148, %p149
      %p151 = scmp.ne.s32.totalorder %s143, %s145
      %p152 = scmp.eq.s32.totalorder %s24, 1
      %p153 = por %p151, %p152
      %p154 = scmp.ne.s32.totalorder %s145, %s146
      %p155 = scmp.eq.s32.totalorder %s24, 0
      %p156 = por %p154, %p155
      %p157 = scmp.ne.s32.totalorder %s145, %s146
      %p158 = scmp.eq.s32.totalorder %s25, 1
      %p159 = por %p157, %p158
      %p161 = scmp.ne.s32.totalorder %s146, %s160
      %p162 = scmp.eq.s32.totalorder %s25, 0
      %p163 = por %p161, %p162
      %s164 = ssub.s32 %s26, %s38
      %p165 = scmp.eq.s32.totalorder %s164, 0
      %s167 = sadd.s32 %s166, 1
      %s168 = scalar_select %p165, %s166, %s167
      %p171 = pneg %p165
      %p172 = scmp.eq.s32.totalorder %s19, 1
      %p173 = por %p171, %p172
      %p174 = scmp.ne.s32.totalorder %s166, %s169
      %p175 = scmp.eq.s32.totalorder %s19, 0
      %p176 = por %p174, %p175
      %p177 = scmp.ne.s32.totalorder %s166, %s169
      %p178 = scmp.eq.s32.totalorder %s24, 1
      %p179 = por %p177, %p178
      %p180 = scmp.ne.s32.totalorder %s169, %s170
      %p181 = scmp.eq.s32.totalorder %s24, 0
      %p182 = por %p180, %p181
      %p183 = scmp.ne.s32.totalorder %s169, %s170
      %p184 = scmp.eq.s32.totalorder %s25, 1
      %p185 = por %p183, %p184
      %p187 = scmp.ne.s32.totalorder %s170, %s186
      %p188 = scmp.eq.s32.totalorder %s25, 0
      %p189 = por %p187, %p188
      %p190 = scmp.le.s32.totalorder 1, %s19
      %p191 = scmp.lt.s32.totalorder %s19, 3
      %p192 = pnand %p190, %p191
      %p193 = pneg %p192
      // Predicated region
      $region9: #{tpu_custom_call.1} parent=5 // pred_check
        _
      $region10: #{tpu_custom_call.1} parent=5 // pred_check_branch
        %195 = sbr.rel (%p192) target = $region12
      $region11: #{tpu_custom_call.1} parent=5 // pred_region
        %s196 = ssub.s32 %s19, 1
        // Predicated region
        $region13: #{tpu_custom_call.1} parent=11 // pred_check
          %p197 = pneg %p83
        $region14: #{tpu_custom_call.1} parent=11 // pred_check_branch
          %199 = sbr.rel (%p197) target = $region16
        $region15: #{tpu_custom_call.1} parent=11 // pred_region
          %s201 = ssub.s32 2048, 2048
          %202 = vsyncadd [#allocation7], %s201
          %s203 = smul.addr %s29, 128
          %s204 = scalar_lea.hbm %s1, %s203
          %s205 = sshll.u32 [#allocation6], 4
          %s206 = int_to_ptr.vmem [resolvable:$true] %s205
          %211 = dma.hbm_to_vmem [thread:$0]  %s204, 2048, %s206, [#allocation7], 128, 128, 8
        $region16: #{tpu_custom_call.1} parent=11 // pred_fallthru
          _
        // Predicated region
        $region17: #{tpu_custom_call.1} parent=11 // pred_check
          %p212 = pneg %p109
        $region18: #{tpu_custom_call.1} parent=11 // pred_check_branch
          %214 = sbr.rel (%p212) target = $region20
        $region19: #{tpu_custom_call.1} parent=11 // pred_region
          %s216 = ssub.s32 16, 16
          %217 = vsyncadd [#allocation7], %s216
          %s218 = smul.addr %s29, 16
          %s219 = scalar_lea.hbm %s2, %s218
          %s221 = sshll.u32 [#allocation8], 4
          %s222 = int_to_ptr.vmem [resolvable:$true] %s221
          %224 = dma.hbm_to_vmem [thread:$0]  %s219, 16, %s222, [#allocation7]
        $region20: #{tpu_custom_call.1} parent=11 // pred_fallthru
          _
        // Predicated region
        $region21: #{tpu_custom_call.1} parent=11 // pred_check
          %p225 = pneg %p135
        $region22: #{tpu_custom_call.1} parent=11 // pred_check_branch
          %227 = sbr.rel (%p225) target = $region24
        $region23: #{tpu_custom_call.1} parent=11 // pred_region
          %s228 = smul.u32 16, %s29
          %s230 = ssub.s32 2048, 2048
          %231 = vsyncadd [#allocation10], %s230
          %s232 = smul.addr %s228, 128
          %s233 = scalar_lea.hbm %s3, %s232
          %s234 = sshll.u32 [#allocation9], 4
          %s235 = int_to_ptr.vmem [resolvable:$true] %s234
          %240 = dma.hbm_to_vmem [thread:$0]  %s233, 2048, %s235, [#allocation10], 128, 128, 8
        $region24: #{tpu_custom_call.1} parent=11 // pred_fallthru
          _
        // Predicated region
        $region25: #{tpu_custom_call.1} parent=11 // pred_check
          %p241 = pneg %p156
        $region26: #{tpu_custom_call.1} parent=11 // pred_check_branch
          %243 = sbr.rel (%p241) target = $region28
        $region27: #{tpu_custom_call.1} parent=11 // pred_region
          %s245 = ssub.s32 16, 16
          %246 = vsyncadd [#allocation10], %s245
          %s248 = sshll.u32 [#allocation11], 4
          %s249 = int_to_ptr.vmem [resolvable:$true] %s248
          %251 = dma.hbm_to_vmem [thread:$0]  %s4, 16, %s249, [#allocation10]
        $region28: #{tpu_custom_call.1} parent=11 // pred_fallthru
          _
      $region12: #{tpu_custom_call.1} parent=5 // pred_fallthru
        _
      %p252 = scmp.lt.s32.totalorder %s19, 2
      // Predicated region
      $region29: #{tpu_custom_call.1} parent=5 // pred_check
        %p253 = pneg %p252
      $region30: #{tpu_custom_call.1} parent=5 // pred_check_branch
        %255 = sbr.rel (%p253) target = $region32
      $region31: #{tpu_custom_call.1} parent=5 // pred_region
        // Predicated region
        $region33: #{tpu_custom_call.1} parent=31 // pred_check
          %p256 = pneg %p51
        $region34: #{tpu_custom_call.1} parent=31 // pred_check_branch
          %258 = sbr.rel (%p256) target = $region36
        $region35: #{tpu_custom_call.1} parent=31 // pred_region
          %s259 = sand.u32 %s41, 1
          %s260 = scalar_lea.sflag [#allocation4], %s259
          %s261 = sand.u32 %s41, 1
          %s262 = smul.addr %s261, 8
          %s263 = scalar_lea.vmem [#allocation3], %s262
          %s265 = ssub.s32 128, 128
          %266 = vsyncadd %s260, %s265
          %s267 = smul.addr %s26, 128
          %s268 = scalar_lea.hbm %s0, %s267
          %s270 = sshll.u32 %s263, 4
          %s271 = int_to_ptr.vmem [resolvable:$true] %s270
          %273 = dma.hbm_to_vmem [thread:$0]  %s268, 128, %s271, %s260
        $region36: #{tpu_custom_call.1} parent=31 // pred_fallthru
          _
      $region32: #{tpu_custom_call.1} parent=5 // pred_fallthru
        _
      %p274 = scmp.le.s32.totalorder 1, %s19
      %p275 = scmp.lt.s32.totalorder %s19, 3
      %p276 = pnand %p274, %p275
      %p277 = pneg %p276
      // Predicated region
      $region37: #{tpu_custom_call.1} parent=5 // pred_check
        _
      $region38: #{tpu_custom_call.1} parent=5 // pred_check_branch
        %279 = sbr.rel (%p276) target = $region40
      $region39: #{tpu_custom_call.1} parent=5 // pred_region
        %s280 = ssub.s32 %s19, 1
        %s281 = sand.u32 %s44, 1
        %s282 = scalar_lea.sflag [#allocation4], %s281
        %s283 = sand.u32 %s44, 1
        %s284 = smul.addr %s283, 8
        %s285 = scalar_lea.vmem [#allocation3], %s284
        // Predicated region
        $region41: #{tpu_custom_call.1} parent=39 // pred_check
          %p286 = pneg %p57
        $region42: #{tpu_custom_call.1} parent=39 // pred_check_branch
          %288 = sbr.rel (%p286) target = $region44
        $region43: #{tpu_custom_call.1} parent=39 // pred_region
          %289 = dma.done %s282, 128
        $region44: #{tpu_custom_call.1} parent=39 // pred_fallthru
          _
        // Predicated region
        $region45: #{tpu_custom_call.1} parent=39 // pred_check
          %p290 = pneg %p83
        $region46: #{tpu_custom_call.1} parent=39 // pred_check_branch
          %292 = sbr.rel (%p290) target = $region48
        $region47: #{tpu_custom_call.1} parent=39 // pred_region
          %293 = dma.done [#allocation7], 2048
        $region48: #{tpu_custom_call.1} parent=39 // pred_fallthru
          _
        // Predicated region
        $region49: #{tpu_custom_call.1} parent=39 // pred_check
          %p294 = pneg %p109
        $region50: #{tpu_custom_call.1} parent=39 // pred_check_branch
          %296 = sbr.rel (%p294) target = $region52
        $region51: #{tpu_custom_call.1} parent=39 // pred_region
          %297 = dma.done [#allocation7], 16
        $region52: #{tpu_custom_call.1} parent=39 // pred_fallthru
          _
        // Predicated region
        $region53: #{tpu_custom_call.1} parent=39 // pred_check
          %p298 = pneg %p135
        $region54: #{tpu_custom_call.1} parent=39 // pred_check_branch
          %300 = sbr.rel (%p298) target = $region56
        $region55: #{tpu_custom_call.1} parent=39 // pred_region
          %301 = dma.done [#allocation10], 2048
        $region56: #{tpu_custom_call.1} parent=39 // pred_fallthru
          _
        // Predicated region
        $region57: #{tpu_custom_call.1} parent=39 // pred_check
          %p302 = pneg %p156
        $region58: #{tpu_custom_call.1} parent=39 // pred_check_branch
          %304 = sbr.rel (%p302) target = $region60
        $region59: #{tpu_custom_call.1} parent=39 // pred_region
          %305 = dma.done [#allocation10], 16
        $region60: #{tpu_custom_call.1} parent=39 // pred_fallthru
          _
        %s306 = sand.u32 %s44, 1
        %s307 = scalar_lea.sflag [#allocation4], %s306
        %s308 = sand.u32 %s44, 1
        %s309 = smul.addr %s308, 8
        %s310 = scalar_lea.vmem [#allocation3], %s309
        %p311 = pneg %p57
        %p312 = pneg %p54
        %p313 = pneg %p83
        %p314 = pneg %p80
        %p315 = pneg %p109
        %p316 = pneg %p106
        %p317 = pneg %p135
        %p318 = pneg %p132
        %p319 = pneg %p156
        %p320 = pneg %p153
        %p321 = pneg %p182
        %p322 = pneg %p179
        %s323 = sand.u32 %s169, 1
        %s324 = scalar_lea.sflag [#allocation5], %s323
        %s325 = sand.u32 %s169, 1
        %s326 = smul.addr %s325, 8
        %s327 = scalar_lea.vmem [#allocation12], %s326
        %s328 = smul.u32 16, %s29
        %p329 = scmp.eq.s32.totalorder %s29, 0
        // Predicated region
        $region61: #{tpu_custom_call.1} parent=39 // pred_check
          %p330 = pneg %p329
        $region62: #{tpu_custom_call.1} parent=39 // pred_check_branch
          %332 = sbr.rel (%p330) target = $region64
        $region63: #{tpu_custom_call.1} parent=39 // pred_region
          %333 = vst [vmem:[#allocation2] sm:$0xff] 0.0
        $region64: #{tpu_custom_call.1} parent=39 // pred_fallthru
          _
        %v334 = vld [vmem:[%s285] sm:$0xff]
        %v335 = vld [vmem:[#allocation6] sm:$0xff]
        %v336 = vld [vmem:[#allocation6 + $0x8] sm:$0xff]
        %v337 = vld [vmem:[#allocation6 + $0x10] sm:$0xff]
        %v338 = vld [vmem:[#allocation6 + $0x18] sm:$0xff]
        %v339 = vld [vmem:[#allocation6 + $0x20] sm:$0xff]
        %v340 = vld [vmem:[#allocation6 + $0x28] sm:$0xff]
        %v341 = vld [vmem:[#allocation6 + $0x30] sm:$0xff]
        %v342 = vld [vmem:[#allocation6 + $0x38] sm:$0xff]
        %v343 = vld [vmem:[#allocation6 + $0x40] sm:$0xff]
        %v344 = vld [vmem:[#allocation6 + $0x48] sm:$0xff]
        %v345 = vld [vmem:[#allocation6 + $0x50] sm:$0xff]
        %v346 = vld [vmem:[#allocation6 + $0x58] sm:$0xff]
        %v347 = vld [vmem:[#allocation6 + $0x60] sm:$0xff]
        %v348 = vld [vmem:[#allocation6 + $0x68] sm:$0xff]
        %v349 = vld [vmem:[#allocation6 + $0x70] sm:$0xff]
        %v350 = vld [vmem:[#allocation6 + $0x78] sm:$0xff]
        %v351 = vld [vmem:[#allocation8] sm:$0x1]
        %v353 = vlaneseq
        %v354 = vshrl.u32 %v353, 7
        %v355 = vsub.s32 0, %v354
        %v356 = vrot.slane %v351, %v355
        %358 = vmatprep.subr.mxu0 0.0
        %359 = vmatpush1.msra.mxu0 %v335
        %360 = vmatprep.subr.mxu0 0.0
        %361 = vmatpush1.msra.mxu0 %v336
        %362 = vmatprep.subr.mxu0 0.0
        %363 = vmatpush1.msra.mxu0 %v337
        %364 = vmatprep.subr.mxu0 0.0
        %365 = vmatpush1.msra.mxu0 %v338
        %366 = vmatprep.subr.mxu0 0.0
        %367 = vmatpush1.msra.mxu0 %v339
        %368 = vmatprep.subr.mxu0 0.0
        %369 = vmatpush1.msra.mxu0 %v340
        %370 = vmatprep.subr.mxu0 0.0
        %371 = vmatpush1.msra.mxu0 %v341
        %372 = vmatprep.subr.mxu0 0.0
        %373 = vmatpush1.msra.mxu0 %v342
        %374 = vmatprep.subr.mxu0 0.0
        %375 = vmatpush1.msra.mxu0 %v343
        %376 = vmatprep.subr.mxu0 0.0
        %377 = vmatpush1.msra.mxu0 %v344
        %378 = vmatprep.subr.mxu0 0.0
        %379 = vmatpush1.msra.mxu0 %v345
        %380 = vmatprep.subr.mxu0 0.0
        %381 = vmatpush1.msra.mxu0 %v346
        %382 = vmatprep.subr.mxu0 0.0
        %383 = vmatpush1.msra.mxu0 %v347
        %384 = vmatprep.subr.mxu0 0.0
        %385 = vmatpush1.msra.mxu0 %v348
        %386 = vmatprep.subr.mxu0 0.0
        %387 = vmatpush1.msra.mxu0 %v349
        %388 = vmatprep.subr.mxu0 0.0
        %389 = vmatpush1.msra.mxu0 %v350
        %390 = vmatprep.subr.mxu0 0.0
        %391 = vmatpush1.msra.mxu0 0.0
        %392 = vmatprep.subr.mxu0 0.0
        %393 = vmatpush1.msra.mxu0 0.0
        %394 = vmatprep.subr.mxu0 0.0
        %395 = vmatpush1.msra.mxu0 0.0
        %396 = vmatprep.subr.mxu0 0.0
        %397 = vmatpush1.msra.mxu0 0.0
        %398 = vmatprep.subr.mxu0 0.0
        %399 = vmatpush1.msra.mxu0 0.0
        %400 = vmatprep.subr.mxu0 0.0
        %401 = vmatpush1.msra.mxu0 0.0
        %402 = vmatprep.subr.mxu0 0.0
        %403 = vmatpush1.msra.mxu0 0.0
        %404 = vmatprep.subr.mxu0 0.0
        %405 = vmatpush1.msra.mxu0 0.0
        %406 = vmatprep.subr.mxu0 0.0
        %407 = vmatpush1.msra.mxu0 0.0
        %408 = vmatprep.subr.mxu0 0.0
        %409 = vmatpush1.msra.mxu0 0.0
        %410 = vmatprep.subr.mxu0 0.0
        %411 = vmatpush1.msra.mxu0 0.0
        %412 = vmatprep.subr.mxu0 0.0
        %413 = vmatpush1.msra.mxu0 0.0
        %414 = vmatprep.subr.mxu0 0.0
        %415 = vmatpush1.msra.mxu0 0.0
        %416 = vmatprep.subr.mxu0 0.0
        %417 = vmatpush1.msra.mxu0 0.0
        %418 = vmatprep.subr.mxu0 0.0
        %419 = vmatpush1.msra.mxu0 0.0
        %420 = vmatprep.subr.mxu0 0.0
        %421 = vmatpush1.msra.mxu0 0.0
        %422 = vmatprep.mubr.f32.mxu0 0.0
        %423 = vmatmul.mubr.f32.gmra.mrb[0].mxu0 %v334
        %v424 = vpop.f32.mrb[0].mxu0
        %v425 = vadd.f32 %v356, %v424
        %v426 = vpop.f32.mrb[0].mxu0
        %427 = vdwg.mxu0
        %v428 = vmax.f32 %v425, 0.0
        %v429 = vld [vmem:[#allocation2] sm:$0xff]
        %v430 = vld [vmem:[#allocation9] sm:$0xff]
        %v431 = vld [vmem:[#allocation9 + $0x8] sm:$0xff]
        %v432 = vld [vmem:[#allocation9 + $0x10] sm:$0xff]
        %v433 = vld [vmem:[#allocation9 + $0x18] sm:$0xff]
        %v434 = vld [vmem:[#allocation9 + $0x20] sm:$0xff]
        %v435 = vld [vmem:[#allocation9 + $0x28] sm:$0xff]
        %v436 = vld [vmem:[#allocation9 + $0x30] sm:$0xff]
        %v437 = vld [vmem:[#allocation9 + $0x38] sm:$0xff]
        %v438 = vld [vmem:[#allocation9 + $0x40] sm:$0xff]
        %v439 = vld [vmem:[#allocation9 + $0x48] sm:$0xff]
        %v440 = vld [vmem:[#allocation9 + $0x50] sm:$0xff]
        %v441 = vld [vmem:[#allocation9 + $0x58] sm:$0xff]
        %v442 = vld [vmem:[#allocation9 + $0x60] sm:$0xff]
        %v443 = vld [vmem:[#allocation9 + $0x68] sm:$0xff]
        %v444 = vld [vmem:[#allocation9 + $0x70] sm:$0xff]
        %v445 = vld [vmem:[#allocation9 + $0x78] sm:$0xff]
        %446 = vmatprep.subr.mxu0 0.0
        %447 = vmatpush1.msra.mxu0 %v430
        %448 = vmatprep.subr.mxu0 0.0
        %449 = vmatpush1.msra.mxu0 %v431
        %450 = vmatprep.subr.mxu0 0.0
        %451 = vmatpush1.msra.mxu0 %v432
        %452 = vmatprep.subr.mxu0 0.0
        %453 = vmatpush1.msra.mxu0 %v433
        %454 = vmatprep.subr.mxu0 0.0
        %455 = vmatpush1.msra.mxu0 %v434
        %456 = vmatprep.subr.mxu0 0.0
        %457 = vmatpush1.msra.mxu0 %v435
        %458 = vmatprep.subr.mxu0 0.0
        %459 = vmatpush1.msra.mxu0 %v436
        %460 = vmatprep.subr.mxu0 0.0
        %461 = vmatpush1.msra.mxu0 %v437
        %462 = vmatprep.subr.mxu0 0.0
        %463 = vmatpush1.msra.mxu0 %v438
        %464 = vmatprep.subr.mxu0 0.0
        %465 = vmatpush1.msra.mxu0 %v439
        %466 = vmatprep.subr.mxu0 0.0
        %467 = vmatpush1.msra.mxu0 %v440
        %468 = vmatprep.subr.mxu0 0.0
        %469 = vmatpush1.msra.mxu0 %v441
        %470 = vmatprep.subr.mxu0 0.0
        %471 = vmatpush1.msra.mxu0 %v442
        %472 = vmatprep.subr.mxu0 0.0
        %473 = vmatpush1.msra.mxu0 %v443
        %474 = vmatprep.subr.mxu0 0.0
        %475 = vmatpush1.msra.mxu0 %v444
        %476 = vmatprep.subr.mxu0 0.0
        %477 = vmatpush1.msra.mxu0 %v445
        %478 = vmatprep.subr.mxu0 0.0
        %479 = vmatpush1.msra.mxu0 0.0
        %480 = vmatprep.subr.mxu0 0.0
        %481 = vmatpush1.msra.mxu0 0.0
        %482 = vmatprep.subr.mxu0 0.0
        %483 = vmatpush1.msra.mxu0 0.0
        %484 = vmatprep.subr.mxu0 0.0
        %485 = vmatpush1.msra.mxu0 0.0
        %486 = vmatprep.subr.mxu0 0.0
        %487 = vmatpush1.msra.mxu0 0.0
        %488 = vmatprep.subr.mxu0 0.0
        %489 = vmatpush1.msra.mxu0 0.0
        %490 = vmatprep.subr.mxu0 0.0
        %491 = vmatpush1.msra.mxu0 0.0
        %492 = vmatprep.subr.mxu0 0.0
        %493 = vmatpush1.msra.mxu0 0.0
        %494 = vmatprep.subr.mxu0 0.0
        %495 = vmatpush1.msra.mxu0 0.0
        %496 = vmatprep.subr.mxu0 0.0
        %497 = vmatpush1.msra.mxu0 0.0
        %498 = vmatprep.subr.mxu0 0.0
        %499 = vmatpush1.msra.mxu0 0.0
        %500 = vmatprep.subr.mxu0 0.0
        %501 = vmatpush1.msra.mxu0 0.0
        %502 = vmatprep.subr.mxu0 0.0
        %503 = vmatpush1.msra.mxu0 0.0
        %504 = vmatprep.subr.mxu0 0.0
        %505 = vmatpush1.msra.mxu0 0.0
        %506 = vmatprep.subr.mxu0 0.0
        %507 = vmatpush1.msra.mxu0 0.0
        %508 = vmatprep.subr.mxu0 0.0
        %509 = vmatpush1.msra.mxu0 0.0
        %510 = vmatprep.mubr.f32.mxu0 0.0
        %511 = vmatmul.mubr.f32.gmra.mrb[0].mxu0 %v428
        %v512 = vpop.f32.mrb[0].mxu0
        %v513 = vadd.f32 0.0, %v512
        %v514 = vpop.f32.mrb[0].mxu0
        %515 = vdwg.mxu0
        %v516 = vadd.f32 %v429, %v513
        %517 = vst [vmem:[#allocation2] sm:$0xff] %v516
        // Predicated region
        $region65: #{tpu_custom_call.1} parent=39 // pred_check
          %p518 = pneg %p329
        $region66: #{tpu_custom_call.1} parent=39 // pred_check_branch
          %520 = sbr.rel (%p518) target = $region68
        $region67: #{tpu_custom_call.1} parent=39 // pred_region
          %v521 = vld [vmem:[#allocation2] sm:$0xff]
          %v522 = vld [vmem:[#allocation11] sm:$0x1]
          %v524 = vlaneseq
          %v525 = vshrl.u32 %v524, 7
          %v526 = vsub.s32 0, %v525
          %v527 = vrot.slane %v522, %v526
          %v529 = vadd.f32 %v521, %v527
          %530 = vst [vmem:[%s327] sm:$0xff] %v529
        $region68: #{tpu_custom_call.1} parent=39 // pred_fallthru
          _
        %s531 = sand.u32 %s169, 1
        %s532 = scalar_lea.sflag [#allocation5], %s531
        %s533 = sand.u32 %s169, 1
        %s534 = smul.addr %s533, 8
        %s535 = scalar_lea.vmem [#allocation12], %s534
        // Predicated region
        $region69: #{tpu_custom_call.1} parent=39 // pred_check
          %p536 = pneg %p179
        $region70: #{tpu_custom_call.1} parent=39 // pred_check_branch
          %538 = sbr.rel (%p536) target = $region72
        $region71: #{tpu_custom_call.1} parent=39 // pred_region
          %s540 = ssub.s32 128, 128
          %541 = vsyncadd %s532, %s540
          %s542 = smul.addr %s28, 128
          %s543 = scalar_lea.hbm %s5, %s542
          %s545 = sshll.u32 %s535, 4
          %s546 = int_to_ptr.vmem [resolvable:$true] %s545
          %548 = dma.vmem_to_hbm [thread:$0]  %s546, 128, %s543, %s532
        $region72: #{tpu_custom_call.1} parent=39 // pred_fallthru
          _
      $region40: #{tpu_custom_call.1} parent=5 // pred_fallthru
        _
      %p549 = scmp.le.s32.totalorder 2, %s19
      // Predicated region
      $region73: #{tpu_custom_call.1} parent=5 // pred_check
        %p550 = pneg %p549
      $region74: #{tpu_custom_call.1} parent=5 // pred_check_branch
        %552 = sbr.rel (%p550) target = $region76
      $region75: #{tpu_custom_call.1} parent=5 // pred_region
        %s553 = ssub.s32 %s19, 2
        // Predicated region
        $region77: #{tpu_custom_call.1} parent=75 // pred_check
          %p554 = pneg %p185
        $region78: #{tpu_custom_call.1} parent=75 // pred_check_branch
          %556 = sbr.rel (%p554) target = $region80
        $region79: #{tpu_custom_call.1} parent=75 // pred_region
          %s557 = sand.u32 %s170, 1
          %s558 = scalar_lea.sflag [#allocation5], %s557
          %s559 = sand.u32 %s170, 1
          %s560 = smul.addr %s559, 8
          %s561 = scalar_lea.vmem [#allocation12], %s560
          %562 = dma.done %s558, 128
        $region80: #{tpu_custom_call.1} parent=75 // pred_fallthru
          _
      $region76: #{tpu_custom_call.1} parent=5 // pred_fallthru
        _
    $region6: #{tpu_custom_call.1} parent=1 // loop_footer
      %s23 = sadd.s32 1, %s19
    $region7: #{tpu_custom_call.1} parent=1 // loop_footer_branch
      %18 = sbr.rel target = $region3
    $region8: #{tpu_custom_call.1} parent=1 // loop_exit
      _
    %563 = vsyncpa [#allocation4], 1
    %s564 = scalar_lea.sflag [#allocation4], 1
    %565 = vsyncpa %s564, 1
    %566 = vsyncpa [#allocation7], 1
    %567 = vsyncpa [#allocation10], 1
    %568 = vsyncpa [#allocation5], 1
    %s569 = scalar_lea.sflag [#allocation5], 1
    %570 = vsyncpa %s569, 1

</llo_original>
